<compile_context>
chip_gen: v5e
topology: v5e:2x2
jax: 0.10.0
libtpu: 0.0.40
codegen_flags: <defaults>
</compile_context>

<pallas_src>
import functools

import jax
import jax.numpy as jnp
from jax import lax
from jax.experimental import pallas as pl
from jax.experimental.pallas import tpu as pltpu


# ------------------------------ small helpers --------------------------------

def _round_up(x, m):
    return (x + m - 1) // m * m


def _vmem_budget(nbytes):
    # explicit scoped-VMEM request sized from the resident arrays (with slack),
    # clamped so it stays legal on v5e/v6e (128 MiB) and v7x (64 MiB) parts.
    return int(min(64 * 1024 * 1024, max(32 * 1024 * 1024, int(1.5 * nbytes))))


def _choose_tile_c(D, C, budget_bytes=8 * 1024 * 1024):
    # proj tile is (D, tile_c) fp32, double-buffered by the pipeline -> 8*D*tile_c bytes.
    t = max(128, (budget_bytes // (8 * max(D, 1))) // 128 * 128)
    return int(min(t, _round_up(C, 128)))


def _row_dot(a, b):
    # a @ b.T without materializing a transpose (contract last dims of both).
    return lax.dot_general(
        a, b, dimension_numbers=(((1,), (1,)), ((), ())),
        preferred_element_type=jnp.float32)


def _softmax_logsoftmax(x):
    m = jnp.max(x, axis=-1, keepdims=True)
    z = x - m
    e = jnp.exp(z)
    s = jnp.sum(e, axis=-1, keepdims=True)
    # divide -> EUP reciprocal (VALU is the scarce slot in this kernel).
    return e * pl.reciprocal(s, approx=True), z - jnp.log(s)


# ====================== kernel A: cmpm (all scales) + GA ======================
# grid = (num_scales,), "arbitrary": per-scale cmpm accumulates into VMEM
# scratch; the (B,B) log-mask is built once (s==0) and the global-align loss +
# the packed (1,2) output write happen on the last scale.

def _cmpm_ga_kernel(lab_col_ref, lab_row_ref, v_ref, t_ref, vfeat_ref, tfeat_ref,
                    out_ref, logmask_sc, cmpm_sc,
                    *, alpha, beta, scale_pos, scale_neg, w_cmpm, w_ga):
    s = pl.program_id(0)
    B = vfeat_ref.shape[0]

    @pl.when(s == 0)
    def _init():
        mask = (lab_col_ref[...] == lab_row_ref[...]).astype(jnp.float32)  # (B,B)
        # torch: labels_mask_norm = mask / mask.norm(dim=1) (no keepdim):
        # element [i,j] is divided by ||mask[j,:]||; mask is symmetric so the
        # axis=0 column norm is identical and avoids an in-kernel transpose.
        # mask is 0/1 -> mask*mask == mask; norm >= 1 so no eps needed here.
        inv_norm = lax.rsqrt(jnp.sum(mask, axis=0, keepdims=True))         # (1,B)
        logmask_sc[...] = jnp.log(mask * inv_norm + 1e-8)
        cmpm_sc[...] = jnp.zeros_like(cmpm_sc)

    # --------------------------- per-scale cmpm ------------------------------
    v = v_ref[0].astype(jnp.float32)                      # (B, D)
    t = t_ref[0].astype(jnp.float32)                      # (B, D)
    D = v.shape[1]
    ones_row = jnp.ones((1, D), jnp.float32)
    # squared row norms directly in (1,B) layout via a tiny MXU contraction
    # (avoids a sublane->lane relayout of a (B,1) vector); rsqrt -> EUP.
    inv_t = lax.rsqrt(_row_dot(ones_row, t * t) + 1e-12)  # (1,B)  1/||t_j||
    inv_v = lax.rsqrt(_row_dot(ones_row, v * v) + 1e-12)  # (1,B)  1/||v_j||
    # One MXU matmul per scale; the second direction is an XLU transpose plus a
    # column rescale instead of a second B x D x B matmul.
    g = _row_dot(v, t)                                    # v @ t.T        (B,B)
    i2t = g * inv_t                                       # v @ t_norm.T
    t2i = jnp.transpose(g) * inv_v                        # t @ v_norm.T
    log_mask = logmask_sc[...]
    p_i2t, lp_i2t = _softmax_logsoftmax(i2t)
    p_t2i, lp_t2i = _softmax_logsoftmax(t2i)
    i2t_loss = jnp.mean(jnp.sum(p_i2t * (lp_i2t - log_mask), axis=1, keepdims=True),
                        axis=0, keepdims=True)
    t2i_loss = jnp.mean(jnp.sum(p_t2i * (lp_t2i - log_mask), axis=1, keepdims=True),
                        axis=0, keepdims=True)
    cmpm_sc[...] += i2t_loss + t2i_loss

    # ----------------- global-align loss + packed scalar write ---------------
    @pl.when(s == pl.num_programs(0) - 1)
    def _finalize():
        # TODO(synk): only the non-mixture global_align_loss (MIXTURE=False) is
        # implemented; alpha/beta are the reference defaults (0.6 / 0.4).
        mask = (lab_col_ref[...] == lab_row_ref[...]).astype(jnp.float32)
        vfeat = vfeat_ref[...].astype(jnp.float32)
        tfeat = tfeat_ref[...].astype(jnp.float32)
        v_n = vfeat * lax.rsqrt(jnp.sum(vfeat * vfeat, axis=-1, keepdims=True) + 1e-12)
        t_n = tfeat * lax.rsqrt(jnp.sum(tfeat * tfeat, axis=-1, keepdims=True) + 1e-12)
        sim = _row_dot(v_n, t_n)                                           # (B,B)
        pos_term = jnp.log(1.0 + jnp.exp(-scale_pos * (sim - alpha)))
        neg_term = jnp.log(1.0 + jnp.exp(scale_neg * (sim - beta)))
        ga_mat = mask * pos_term + (1.0 - mask) * neg_term
        ga = jnp.sum(jnp.sum(ga_mat, axis=1, keepdims=True),
                     axis=0, keepdims=True) * (2.0 / B)                    # (1,1)
        # pack [cmpm, ga] into one (1,2) store: a single output DMA.
        lane = lax.broadcasted_iota(jnp.int32, (1, 2), 1)
        out_ref[...] = jnp.where(lane == 0, w_cmpm * cmpm_sc[...], w_ga * ga)


# ============== kernel B: instance loss (label-smoothed CE over C) ============
# grid = (num_class_tiles,), "arbitrary".  image+text features are stacked to
# (2B, D) so each class tile needs one matmul.  Per-row accumulators (online
# max / sum-exp, running sum of logits, logit at the label column) live in VMEM
# scratch; the loss is finalized on the last tile:
#   loss_i = lse_i - (1-eps)*logit_{i,y_i} - (eps/C) * sum_j logit_{i,j}
# and   instance_loss = (sum over 2B rows) / B  (= img-mean + txt-mean).

def _instance_kernel(lab_ref, feat_ref, proj_ref, out_ref,
                     m_sc, l_sc, slog_sc, llog_sc,
                     *, num_classes, tile_c, epsilon, w_inst, batch, pad_classes):
    j = pl.program_id(0)

    @pl.when(j == 0)
    def _init():
        m_sc[...] = jnp.full_like(m_sc, -jnp.inf)
        l_sc[...] = jnp.zeros_like(l_sc)
        slog_sc[...] = jnp.zeros_like(slog_sc)
        llog_sc[...] = jnp.zeros_like(llog_sc)

    feats = feat_ref[...].astype(jnp.float32)                       # (2B, D)
    logits = jnp.dot(feats, proj_ref[...].astype(jnp.float32),
                     preferred_element_type=jnp.float32)            # (2B, tile_c)
    col = lax.broadcasted_iota(jnp.int32, logits.shape, 1) + j * tile_c
    if pad_classes:  # static: only when C was padded up to a tile multiple
        valid = col < num_classes
        logits_lse = jnp.where(valid, logits, -1e30)
        logits_sum = jnp.where(valid, logits, 0.0)
    else:
        logits_lse = logits
        logits_sum = logits

    # online log-sum-exp across class tiles
    m_old = m_sc[...]
    m_new = jnp.maximum(m_old, jnp.max(logits_lse, axis=-1, keepdims=True))
    l_sc[...] = (jnp.exp(m_old - m_new) * l_sc[...]
                 + jnp.sum(jnp.exp(logits_lse - m_new), axis=-1, keepdims=True))
    m_sc[...] = m_new
    # running sum_j logits and the logit at the label column (no (B,C) one-hot
    # or smoothed-target tensor is ever materialized).
    slog_sc[...] += jnp.sum(logits_sum, axis=-1, keepdims=True)
    onehot = (col == lab_ref[...]).astype(jnp.float32)              # (2B, tile_c)
    llog_sc[...] += jnp.sum(onehot * logits, axis=-1, keepdims=True)

    @pl.when(j == pl.num_programs(0) - 1)
    def _finalize():
        lse = m_sc[...] + jnp.log(l_sc[...])                        # (2B, 1)
        per_row = (lse - (1.0 - epsilon) * llog_sc[...]
                   - (epsilon / num_classes) * slog_sc[...])
        total = jnp.sum(per_row, axis=0, keepdims=True)             # (1, 1)
        out_ref[...] = w_inst * total * (1.0 / batch)


# ------------------------------ python wrapper --------------------------------

class LossComputation:
    """JAX/Pallas port of MCM-HC multiscale_head LossComputation.forward."""

    def __init__(self, cfg, key, instance_tile_c=None):
        self.mixture = cfg["MIXTURE"]
        self.bnneck = cfg["BNNECK"]
        self.epsilon = cfg["EPSILON"]
        self.learn_scale = cfg["LEARN_SCALE"]
        self.loss_type = dict(zip(cfg["LOSS_TYPE"], cfg["LOSS_WEIGHT"]))
        # TODO(synk): LEARN_SCALE=True makes scale_pos/neg trainable in torch;
        # here they are static floats baked into the kernel.
        self.scale_pos = 10.0
        self.scale_neg = 40.0
        D, C = cfg["FEATURE_SIZE"], cfg["NUM_CLASSES"]
        # xavier_uniform(gain=1): U(-a, a), a = sqrt(6 / (fan_in + fan_out))
        a = (6.0 / (D + C)) ** 0.5
        self.projection = jax.random.uniform(key, (D, C), jnp.float32, -a, a)
        self.instance_tile_c = instance_tile_c

    def __call__(self, visual_embeds, textual_embeds, captions,
                 visual_embed_bn=None, textual_embed_bn=None):
        labels = jnp.asarray([c["id"] for c in captions], dtype=jnp.int32)
        B = int(labels.shape[0])
        S = len(visual_embeds)
        D = int(visual_embeds[0].shape[1])
        C = int(self.projection.shape[1])

        lab_col = labels.reshape(B, 1)
        lab_row = labels.reshape(1, B)

        if self.bnneck:
            vfeat, tfeat = visual_embed_bn, textual_embed_bn
        else:
            vfeat, tfeat = visual_embeds[-1], textual_embeds[-1]

        w_cmpm = float(self.loss_type.get("cmpm_loss", 0.0))
        w_inst = float(self.loss_type.get("instance_loss", 0.0))
        w_ga = float(self.loss_type.get("global_align_loss", 0.0))

        loss = {}

        # ----------------------- cmpm + global-align kernel -------------------
        if ("cmpm_loss" in self.loss_type) or ("global_align_loss" in self.loss_type):
            vstack = jnp.stack(visual_embeds, axis=0)      # (S, B, D)
            tstack = jnp.stack(textual_embeds, axis=0)     # (S, B, D)
            kern = functools.partial(
                _cmpm_ga_kernel, alpha=0.6, beta=0.4,
                scale_pos=float(self.scale_pos), scale_neg=float(self.scale_neg),
                w_cmpm=w_cmpm, w_ga=w_ga)
            vmem_a = _vmem_budget(4 * (10 * B * D + 12 * B * B) + (2 << 20))
            packed = pl.pallas_call(
                kern,
                out_shape=jax.ShapeDtypeStruct((1, 2), jnp.float32),
                grid=(S,),
                in_specs=[
                    pl.BlockSpec((B, 1), lambda s: (0, 0)),
                    pl.BlockSpec((1, B), lambda s: (0, 0)),
                    pl.BlockSpec((1, B, D), lambda s: (s, 0, 0)),
                    pl.BlockSpec((1, B, D), lambda s: (s, 0, 0)),
                    pl.BlockSpec((B, D), lambda s: (0, 0)),
                    pl.BlockSpec((B, D), lambda s: (0, 0)),
                ],
                out_specs=pl.BlockSpec((1, 2), lambda s: (0, 0)),
                scratch_shapes=[pltpu.VMEM((B, B), jnp.float32),
                                pltpu.VMEM((1, 1), jnp.float32)],
                compiler_params=pltpu.CompilerParams(
                    dimension_semantics=("arbitrary",),
                    vmem_limit_bytes=vmem_a),
            )(lab_col, lab_row, vstack, tstack, vfeat, tfeat)
            if "cmpm_loss" in self.loss_type:
                loss["cmpm_loss"] = packed[0, 0]
            if "global_align_loss" in self.loss_type:
                loss["global_align_loss"] = packed[0, 1]

        # ----------------------- instance-loss kernel -------------------------
        if "instance_loss" in self.loss_type:
            tile_c = self.instance_tile_c or _choose_tile_c(D, C)
            c_pad = _round_up(C, tile_c)
            proj = self.projection
            if c_pad != C:
                proj = jnp.pad(proj, ((0, 0), (0, c_pad - C)))
            feats = jnp.concatenate([vfeat, tfeat], axis=0)        # (2B, D)
            lab2 = jnp.concatenate([lab_col, lab_col], axis=0)     # (2B, 1)
            n_tiles = c_pad // tile_c
            kern = functools.partial(
                _instance_kernel, num_classes=C, tile_c=tile_c,
                epsilon=float(self.epsilon), w_inst=w_inst, batch=B,
                pad_classes=(c_pad != C))
            vmem_b = _vmem_budget(
                4 * (4 * B * D + 2 * D * tile_c + 6 * 2 * B * tile_c + 16 * B)
                + (2 << 20))
            inst = pl.pallas_call(
                kern,
                out_shape=jax.ShapeDtypeStruct((1, 1), jnp.float32),
                grid=(n_tiles,),
                in_specs=[
                    pl.BlockSpec((2 * B, 1), lambda j: (0, 0)),
                    pl.BlockSpec((2 * B, D), lambda j: (0, 0)),
                    pl.BlockSpec((D, tile_c), lambda j: (0, j)),
                ],
                out_specs=pl.BlockSpec((1, 1), lambda j: (0, 0)),
                scratch_shapes=[pltpu.VMEM((2 * B, 1), jnp.float32)
                                for _ in range(4)],
                compiler_params=pltpu.CompilerParams(
                    dimension_semantics=("arbitrary",),
                    vmem_limit_bytes=vmem_b),
            )(lab2, feats, proj)
            loss["instance_loss"] = inst[0, 0]

        return loss


# ----------------------------------- main -------------------------------------

if __name__ == "__main__":
    key = jax.random.PRNGKey(0)
    kp, kv0, kv1, kt0, kt1, kl = jax.random.split(key, 6)

    # Small but sublane/lane-aligned demo shapes: B multiple of 8, D multiple
    # of 128, C a multiple of the class tile so the instance grid has 2 steps.
    B, D, C, S = 8, 128, 256, 2
    cfg = dict(
        MIXTURE=False,
        BNNECK=False,
        EPSILON=0.1,
        LEARN_SCALE=False,
        LOSS_TYPE=("cmpm_loss", "instance_loss", "global_align_loss"),
        LOSS_WEIGHT=(1.0, 1.0, 1.0),
        FEATURE_SIZE=D,
        NUM_CLASSES=C,
    )

    model = LossComputation(cfg, kp, instance_tile_c=128)

    visual_embeds = [
        jax.random.normal(kv0, (B, D), jnp.float32),
        jax.random.normal(kv1, (B, D), jnp.float32),
    ]
    textual_embeds = [
        jax.random.normal(kt0, (B, D), jnp.float32),
        jax.random.normal(kt1, (B, D), jnp.float32),
    ]
    labels = jax.random.randint(kl, (B,), 0, C)
    captions = [{"id": int(l)} for l in labels]   # mimics caption.get_field('id')

    loss = model(visual_embeds, textual_embeds, captions)
    jax.block_until_ready(loss)
    print("KERNEL_OK")
</pallas_src>

<mosaic_0001>
module attributes {stable_mosaic.version = 11 : i64} {
  func.func @_cmpm_ga_kernel(%arg0: i32, %arg1: memref<8x1xi32, #tpu.memory_space<vmem>>, %arg2: memref<1x8xi32, #tpu.memory_space<vmem>>, %arg3: memref<1x8x128xf32, #tpu.memory_space<vmem>>, %arg4: memref<1x8x128xf32, #tpu.memory_space<vmem>>, %arg5: memref<8x128xf32, #tpu.memory_space<vmem>>, %arg6: memref<8x128xf32, #tpu.memory_space<vmem>>, %arg7: memref<1x2xf32, #tpu.memory_space<vmem>>, %arg8: memref<8x8xf32, #tpu.memory_space<vmem>>, %arg9: memref<1x1xf32, #tpu.memory_space<vmem>>) attributes {dimension_semantics = [#tpu.dimension_semantics<arbitrary>], iteration_bounds = array<i64: 2>, scalar_prefetch = 0 : i64, scratch_operands = 2 : i64, tpu.core_type = #tpu.core_type<tc>, window_params = [{pipeline_mode = #tpu.pipeline_mode<synchronous>, transform_indices = @transform_0, window_bounds = array<i64: 8, 1>}, {pipeline_mode = #tpu.pipeline_mode<synchronous>, transform_indices = @transform_1, window_bounds = array<i64: 1, 8>}, {transform_indices = @transform_2, window_bounds = array<i64: 1, 8, 128>}, {transform_indices = @transform_3, window_bounds = array<i64: 1, 8, 128>}, {pipeline_mode = #tpu.pipeline_mode<synchronous>, transform_indices = @transform_4, window_bounds = array<i64: 8, 128>}, {pipeline_mode = #tpu.pipeline_mode<synchronous>, transform_indices = @transform_5, window_bounds = array<i64: 8, 128>}, {pipeline_mode = #tpu.pipeline_mode<synchronous>, transform_indices = @transform_6, window_bounds = array<i64: 1, 2>}]} {
    %c0_i32 = arith.constant 0 : i32
    %0 = arith.cmpi eq, %arg0, %c0_i32 : i32
    %1 = arith.extui %0 : i1 to i32
    %c0_i32_0 = arith.constant 0 : i32
    %2 = arith.cmpi ne, %1, %c0_i32_0 : i32
    scf.if %2 {
      %c0_28 = arith.constant 0 : index
      %c0_29 = arith.constant 0 : index
      %74 = vector.load %arg1[%c0_28, %c0_29] : memref<8x1xi32, #tpu.memory_space<vmem>>, vector<8x1xi32>
      %c0_30 = arith.constant 0 : index
      %c0_31 = arith.constant 0 : index
      %75 = vector.load %arg2[%c0_30, %c0_31] : memref<1x8xi32, #tpu.memory_space<vmem>>, vector<1x8xi32>
      %76 = vector.broadcast %74 : vector<8x1xi32> to vector<8x8xi32>
      %77 = vector.broadcast %75 : vector<1x8xi32> to vector<8x8xi32>
      %78 = arith.cmpi eq, %76, %77 : vector<8x8xi32>
      %79 = arith.extui %78 : vector<8x8xi1> to vector<8x8xi32>
      %80 = arith.sitofp %79 : vector<8x8xi32> to vector<8x8xf32>
      %cst_32 = arith.constant dense<0.000000e+00> : vector<8xf32>
      %81 = vector.multi_reduction <add>, %80, %cst_32 [0] : vector<8x8xf32> to vector<8xf32>
      %82 = vector.shape_cast %81 : vector<8xf32> to vector<1x8xf32>
      %83 = math.rsqrt %82 : vector<1x8xf32>
      %84 = vector.broadcast %83 : vector<1x8xf32> to vector<8x8xf32>
      %85 = arith.mulf %80, %84 : vector<8x8xf32>
      %cst_33 = arith.constant 9.99999993E-9 : f32
      %86 = vector.broadcast %cst_33 : f32 to vector<8x8xf32>
      %87 = arith.addf %85, %86 : vector<8x8xf32>
      %88 = math.log %87 : vector<8x8xf32>
      %c0_34 = arith.constant 0 : index
      %c0_35 = arith.constant 0 : index
      %89 = vector.load %arg8[%c0_34, %c0_35] : memref<8x8xf32, #tpu.memory_space<vmem>>, vector<8x8xf32>
      tpu.vector_store %arg8[%c0_34, %c0_35], %88 {strides = array<i32>} : memref<8x8xf32, #tpu.memory_space<vmem>>, vector<8x8xf32>,
      %cst_36 = arith.constant 0.000000e+00 : f32
      %90 = vector.broadcast %cst_36 : f32 to vector<1x1xf32>
      %c0_37 = arith.constant 0 : index
      %c0_38 = arith.constant 0 : index
      %91 = vector.load %arg9[%c0_37, %c0_38] : memref<1x1xf32, #tpu.memory_space<vmem>>, vector<1x1xf32>
      tpu.vector_store %arg9[%c0_37, %c0_38], %90 {strides = array<i32>} : memref<1x1xf32, #tpu.memory_space<vmem>>, vector<1x1xf32>,
    } else {
    }
    %c0 = arith.constant 0 : index
    %c0_1 = arith.constant 0 : index
    %c0_2 = arith.constant 0 : index
    %3 = vector.load %arg3[%c0, %c0_1, %c0_2] : memref<1x8x128xf32, #tpu.memory_space<vmem>>, vector<1x8x128xf32>
    %4 = vector.shape_cast %3 : vector<1x8x128xf32> to vector<8x128xf32>
    %c0_3 = arith.constant 0 : index
    %c0_4 = arith.constant 0 : index
    %c0_5 = arith.constant 0 : index
    %5 = vector.load %arg4[%c0_3, %c0_4, %c0_5] : memref<1x8x128xf32, #tpu.memory_space<vmem>>, vector<1x8x128xf32>
    %6 = vector.shape_cast %5 : vector<1x8x128xf32> to vector<8x128xf32>
    %cst = arith.constant 1.000000e+00 : f32
    %7 = vector.broadcast %cst : f32 to vector<1x128xf32>
    %8 = arith.mulf %6, %6 : vector<8x128xf32>
    %cst_6 = arith.constant dense<0.000000e+00> : vector<1x8xf32>
    %9 = tpu.matmul %7, %8, %cst_6 {dimension_numbers = #tpu.dot_dimension_numbers<[1], [1], [0], [0], [0, 0, 1, 0], [], []>} : vector<1x128xf32>, vector<8x128xf32>, vector<1x8xf32> -> vector<1x8xf32>
    %cst_7 = arith.constant 9.99999996E-13 : f32
    %10 = vector.broadcast %cst_7 : f32 to vector<1x8xf32>
    %11 = arith.addf %9, %10 : vector<1x8xf32>
    %12 = math.rsqrt %11 : vector<1x8xf32>
    %13 = arith.mulf %4, %4 : vector<8x128xf32>
    %cst_8 = arith.constant dense<0.000000e+00> : vector<1x8xf32>
    %14 = tpu.matmul %7, %13, %cst_8 {dimension_numbers = #tpu.dot_dimension_numbers<[1], [1], [0], [0], [0, 0, 1, 0], [], []>} : vector<1x128xf32>, vector<8x128xf32>, vector<1x8xf32> -> vector<1x8xf32>
    %cst_9 = arith.constant 9.99999996E-13 : f32
    %15 = vector.broadcast %cst_9 : f32 to vector<1x8xf32>
    %16 = arith.addf %14, %15 : vector<1x8xf32>
    %17 = math.rsqrt %16 : vector<1x8xf32>
    %cst_10 = arith.constant dense<0.000000e+00> : vector<8x8xf32>
    %18 = tpu.matmul %4, %6, %cst_10 {dimension_numbers = #tpu.dot_dimension_numbers<[1], [1], [0], [0], [0, 0, 1, 0], [], []>} : vector<8x128xf32>, vector<8x128xf32>, vector<8x8xf32> -> vector<8x8xf32>
    %19 = vector.broadcast %12 : vector<1x8xf32> to vector<8x8xf32>
    %20 = arith.mulf %18, %19 : vector<8x8xf32>
    %21 = tpu.transpose %18, [1, 0] : vector<8x8xf32> -> vector<8x8xf32>
    %22 = vector.broadcast %17 : vector<1x8xf32> to vector<8x8xf32>
    %23 = arith.mulf %21, %22 : vector<8x8xf32>
    %c0_11 = arith.constant 0 : index
    %c0_12 = arith.constant 0 : index
    %24 = vector.load %arg8[%c0_11, %c0_12] : memref<8x8xf32, #tpu.memory_space<vmem>>, vector<8x8xf32>
    %cst_13 = arith.constant dense<0xFF800000> : vector<8xf32>
    %25 = vector.multi_reduction <maximumf>, %20, %cst_13 [1] : vector<8x8xf32> to vector<8xf32>
    %26 = vector.shape_cast %25 : vector<8xf32> to vector<8x1xf32>
    %27 = vector.broadcast %26 : vector<8x1xf32> to vector<8x8xf32>
    %28 = arith.subf %20, %27 : vector<8x8xf32>
    %29 = math.exp %28 : vector<8x8xf32>
    %cst_14 = arith.constant dense<0.000000e+00> : vector<8xf32>
    %30 = vector.multi_reduction <add>, %29, %cst_14 [1] : vector<8x8xf32> to vector<8xf32>
    %31 = vector.shape_cast %30 : vector<8xf32> to vector<8x1xf32>
    %32 = tpu.reciprocal %31 {approx = true} : vector<8x1xf32> -> vector<8x1xf32>
    %33 = vector.broadcast %32 : vector<8x1xf32> to vector<8x8xf32>
    %34 = arith.mulf %29, %33 : vector<8x8xf32>
    %35 = math.log %31 : vector<8x1xf32>
    %36 = vector.broadcast %35 : vector<8x1xf32> to vector<8x8xf32>
    %37 = arith.subf %28, %36 : vector<8x8xf32>
    %cst_15 = arith.constant dense<0xFF800000> : vector<8xf32>
    %38 = vector.multi_reduction <maximumf>, %23, %cst_15 [1] : vector<8x8xf32> to vector<8xf32>
    %39 = vector.shape_cast %38 : vector<8xf32> to vector<8x1xf32>
    %40 = vector.broadcast %39 : vector<8x1xf32> to vector<8x8xf32>
    %41 = arith.subf %23, %40 : vector<8x8xf32>
    %42 = math.exp %41 : vector<8x8xf32>
    %cst_16 = arith.constant dense<0.000000e+00> : vector<8xf32>
    %43 = vector.multi_reduction <add>, %42, %cst_16 [1] : vector<8x8xf32> to vector<8xf32>
    %44 = vector.shape_cast %43 : vector<8xf32> to vector<8x1xf32>
    %45 = tpu.reciprocal %44 {approx = true} : vector<8x1xf32> -> vector<8x1xf32>
    %46 = vector.broadcast %45 : vector<8x1xf32> to vector<8x8xf32>
    %47 = arith.mulf %42, %46 : vector<8x8xf32>
    %48 = math.log %44 : vector<8x1xf32>
    %49 = vector.broadcast %48 : vector<8x1xf32> to vector<8x8xf32>
    %50 = arith.subf %41, %49 : vector<8x8xf32>
    %51 = arith.subf %37, %24 : vector<8x8xf32>
    %52 = arith.mulf %34, %51 : vector<8x8xf32>
    %cst_17 = arith.constant dense<0.000000e+00> : vector<8xf32>
    %53 = vector.multi_reduction <add>, %52, %cst_17 [1] : vector<8x8xf32> to vector<8xf32>
    %54 = vector.shape_cast %53 : vector<8xf32> to vector<8x1xf32>
    %cst_18 = arith.constant dense<0.000000e+00> : vector<1xf32>
    %55 = vector.multi_reduction <add>, %54, %cst_18 [0] : vector<8x1xf32> to vector<1xf32>
    %56 = vector.shape_cast %55 : vector<1xf32> to vector<1x1xf32>
    %cst_19 = arith.constant 8.000000e+00 : f32
    %57 = vector.broadcast %cst_19 : f32 to vector<1x1xf32>
    %58 = arith.divf %56, %57 : vector<1x1xf32>
    %59 = arith.subf %50, %24 : vector<8x8xf32>
    %60 = arith.mulf %47, %59 : vector<8x8xf32>
    %cst_20 = arith.constant dense<0.000000e+00> : vector<8xf32>
    %61 = vector.multi_reduction <add>, %60, %cst_20 [1] : vector<8x8xf32> to vector<8xf32>
    %62 = vector.shape_cast %61 : vector<8xf32> to vector<8x1xf32>
    %cst_21 = arith.constant dense<0.000000e+00> : vector<1xf32>
    %63 = vector.multi_reduction <add>, %62, %cst_21 [0] : vector<8x1xf32> to vector<1xf32>
    %64 = vector.shape_cast %63 : vector<1xf32> to vector<1x1xf32>
    %cst_22 = arith.constant 8.000000e+00 : f32
    %65 = vector.broadcast %cst_22 : f32 to vector<1x1xf32>
    %66 = arith.divf %64, %65 : vector<1x1xf32>
    %c0_23 = arith.constant 0 : index
    %c0_24 = arith.constant 0 : index
    %67 = vector.load %arg9[%c0_23, %c0_24] : memref<1x1xf32, #tpu.memory_space<vmem>>, vector<1x1xf32>
    %68 = arith.addf %58, %66 : vector<1x1xf32>
    %69 = arith.addf %67, %68 : vector<1x1xf32>
    %c0_25 = arith.constant 0 : index
    %c0_26 = arith.constant 0 : index
    %70 = vector.load %arg9[%c0_25, %c0_26] : memref<1x1xf32, #tpu.memory_space<vmem>>, vector<1x1xf32>
    tpu.vector_store %arg9[%c0_25, %c0_26], %69 {strides = array<i32>} : memref<1x1xf32, #tpu.memory_space<vmem>>, vector<1x1xf32>,
    %c1_i32 = arith.constant 1 : i32
    %71 = arith.cmpi eq, %arg0, %c1_i32 : i32
    %72 = arith.extui %71 : i1 to i32
    %c0_i32_27 = arith.constant 0 : i32
    %73 = arith.cmpi ne, %72, %c0_i32_27 : i32
    scf.if %73 {
      %c0_28 = arith.constant 0 : index
      %c0_29 = arith.constant 0 : index
      %74 = vector.load %arg1[%c0_28, %c0_29] : memref<8x1xi32, #tpu.memory_space<vmem>>, vector<8x1xi32>
      %c0_30 = arith.constant 0 : index
      %c0_31 = arith.constant 0 : index
      %75 = vector.load %arg2[%c0_30, %c0_31] : memref<1x8xi32, #tpu.memory_space<vmem>>, vector<1x8xi32>
      %76 = vector.broadcast %74 : vector<8x1xi32> to vector<8x8xi32>
      %77 = vector.broadcast %75 : vector<1x8xi32> to vector<8x8xi32>
      %78 = arith.cmpi eq, %76, %77 : vector<8x8xi32>
      %79 = arith.extui %78 : vector<8x8xi1> to vector<8x8xi32>
      %80 = arith.sitofp %79 : vector<8x8xi32> to vector<8x8xf32>
      %c0_32 = arith.constant 0 : index
      %c0_33 = arith.constant 0 : index
      %81 = vector.load %arg5[%c0_32, %c0_33] : memref<8x128xf32, #tpu.memory_space<vmem>>, vector<8x128xf32>
      %c0_34 = arith.constant 0 : index
      %c0_35 = arith.constant 0 : index
      %82 = vector.load %arg6[%c0_34, %c0_35] : memref<8x128xf32, #tpu.memory_space<vmem>>, vector<8x128xf32>
      %83 = arith.mulf %81, %81 : vector<8x128xf32>
      %cst_36 = arith.constant dense<0.000000e+00> : vector<8xf32>
      %84 = vector.multi_reduction <add>, %83, %cst_36 [1] : vector<8x128xf32> to vector<8xf32>
      %85 = vector.shape_cast %84 : vector<8xf32> to vector<8x1xf32>
      %cst_37 = arith.constant 9.99999996E-13 : f32
      %86 = vector.broadcast %cst_37 : f32 to vector<8x1xf32>
      %87 = arith.addf %85, %86 : vector<8x1xf32>
      %88 = math.rsqrt %87 : vector<8x1xf32>
      %89 = vector.broadcast %88 : vector<8x1xf32> to vector<8x128xf32>
      %90 = arith.mulf %81, %89 : vector<8x128xf32>
      %91 = arith.mulf %82, %82 : vector<8x128xf32>
      %cst_38 = arith.constant dense<0.000000e+00> : vector<8xf32>
      %92 = vector.multi_reduction <add>, %91, %cst_38 [1] : vector<8x128xf32> to vector<8xf32>
      %93 = vector.shape_cast %92 : vector<8xf32> to vector<8x1xf32>
      %cst_39 = arith.constant 9.99999996E-13 : f32
      %94 = vector.broadcast %cst_39 : f32 to vector<8x1xf32>
      %95 = arith.addf %93, %94 : vector<8x1xf32>
      %96 = math.rsqrt %95 : vector<8x1xf32>
      %97 = vector.broadcast %96 : vector<8x1xf32> to vector<8x128xf32>
      %98 = arith.mulf %82, %97 : vector<8x128xf32>
      %cst_40 = arith.constant dense<0.000000e+00> : vector<8x8xf32>
      %99 = tpu.matmul %90, %98, %cst_40 {dimension_numbers = #tpu.dot_dimension_numbers<[1], [1], [0], [0], [0, 0, 1, 0], [], []>} : vector<8x128xf32>, vector<8x128xf32>, vector<8x8xf32> -> vector<8x8xf32>
      %cst_41 = arith.constant 6.000000e-01 : f32
      %100 = vector.broadcast %cst_41 : f32 to vector<8x8xf32>
      %101 = arith.subf %99, %100 : vector<8x8xf32>
      %cst_42 = arith.constant -1.000000e+01 : f32
      %102 = vector.broadcast %cst_42 : f32 to vector<8x8xf32>
      %103 = arith.mulf %102, %101 : vector<8x8xf32>
      %104 = math.exp %103 : vector<8x8xf32>
      %cst_43 = arith.constant 1.000000e+00 : f32
      %105 = vector.broadcast %cst_43 : f32 to vector<8x8xf32>
      %106 = arith.addf %105, %104 : vector<8x8xf32>
      %107 = math.log %106 : vector<8x8xf32>
      %cst_44 = arith.constant 4.000000e-01 : f32
      %108 = vector.broadcast %cst_44 : f32 to vector<8x8xf32>
      %109 = arith.subf %99, %108 : vector<8x8xf32>
      %cst_45 = arith.constant 4.000000e+01 : f32
      %110 = vector.broadcast %cst_45 : f32 to vector<8x8xf32>
      %111 = arith.mulf %110, %109 : vector<8x8xf32>
      %112 = math.exp %111 : vector<8x8xf32>
      %cst_46 = arith.constant 1.000000e+00 : f32
      %113 = vector.broadcast %cst_46 : f32 to vector<8x8xf32>
      %114 = arith.addf %113, %112 : vector<8x8xf32>
      %115 = math.log %114 : vector<8x8xf32>
      %116 = arith.mulf %80, %107 : vector<8x8xf32>
      %cst_47 = arith.constant 1.000000e+00 : f32
      %117 = vector.broadcast %cst_47 : f32 to vector<8x8xf32>
      %118 = arith.subf %117, %80 : vector<8x8xf32>
      %119 = arith.mulf %118, %115 : vector<8x8xf32>
      %120 = arith.addf %116, %119 : vector<8x8xf32>
      %cst_48 = arith.constant dense<0.000000e+00> : vector<8xf32>
      %121 = vector.multi_reduction <add>, %120, %cst_48 [1] : vector<8x8xf32> to vector<8xf32>
      %122 = vector.shape_cast %121 : vector<8xf32> to vector<8x1xf32>
      %cst_49 = arith.constant dense<0.000000e+00> : vector<1xf32>
      %123 = vector.multi_reduction <add>, %122, %cst_49 [0] : vector<8x1xf32> to vector<1xf32>
      %124 = vector.shape_cast %123 : vector<1xf32> to vector<1x1xf32>
      %cst_50 = arith.constant 2.500000e-01 : f32
      %125 = vector.broadcast %cst_50 : f32 to vector<1x1xf32>
      %126 = arith.mulf %124, %125 : vector<1x1xf32>
      %127 = tpu.iota {dimensions = array<i32: 1>} : vector<1x2xi32>
      %c0_i32_51 = arith.constant 0 : i32
      %128 = vector.broadcast %c0_i32_51 : i32 to vector<1x2xi32>
      %129 = arith.cmpi eq, %127, %128 : vector<1x2xi32>
      %c0_52 = arith.constant 0 : index
      %c0_53 = arith.constant 0 : index
      %130 = vector.load %arg9[%c0_52, %c0_53] : memref<1x1xf32, #tpu.memory_space<vmem>>, vector<1x1xf32>
      %cst_54 = arith.constant 1.000000e+00 : f32
      %131 = vector.broadcast %cst_54 : f32 to vector<1x1xf32>
      %132 = arith.mulf %131, %130 : vector<1x1xf32>
      %cst_55 = arith.constant 1.000000e+00 : f32
      %133 = vector.broadcast %cst_55 : f32 to vector<1x1xf32>
      %134 = arith.mulf %133, %126 : vector<1x1xf32>
      %135 = vector.shape_cast %132 : vector<1x1xf32> to vector<1x1xf32>
      %136 = vector.broadcast %135 : vector<1x1xf32> to vector<1x2xf32>
      %137 = vector.shape_cast %134 : vector<1x1xf32> to vector<1x1xf32>
      %138 = vector.broadcast %137 : vector<1x1xf32> to vector<1x2xf32>
      %139 = arith.select %129, %136, %138 : vector<1x2xi1>, vector<1x2xf32>
      %c0_56 = arith.constant 0 : index
      %c0_57 = arith.constant 0 : index
      %140 = vector.load %arg7[%c0_56, %c0_57] : memref<1x2xf32, #tpu.memory_space<vmem>>, vector<1x2xf32>
      tpu.vector_store %arg7[%c0_56, %c0_57], %139 {strides = array<i32>} : memref<1x2xf32, #tpu.memory_space<vmem>>, vector<1x2xf32>,
    } else {
    }
    return
  }
  func.func @transform_0(%arg0: i32) -> (i32, i32) {
    %c0_i32 = arith.constant 0 : i32
    %c0_i32_0 = arith.constant 0 : i32
    %c0_i32_1 = arith.constant 0 : i32
    return %c0_i32, %c0_i32_0 : i32, i32
  }
  func.func @transform_1(%arg0: i32) -> (i32, i32) {
    %c0_i32 = arith.constant 0 : i32
    %c0_i32_0 = arith.constant 0 : i32
    %c0_i32_1 = arith.constant 0 : i32
    return %c0_i32, %c0_i32_0 : i32, i32
  }
  func.func @transform_2(%arg0: i32) -> (i32, i32, i32) {
    %c0_i32 = arith.constant 0 : i32
    %c0_i32_0 = arith.constant 0 : i32
    %c0_i32_1 = arith.constant 0 : i32
    return %arg0, %c0_i32, %c0_i32_0 : i32, i32, i32
  }
  func.func @transform_3(%arg0: i32) -> (i32, i32, i32) {
    %c0_i32 = arith.constant 0 : i32
    %c0_i32_0 = arith.constant 0 : i32
    %c0_i32_1 = arith.constant 0 : i32
    return %arg0, %c0_i32, %c0_i32_0 : i32, i32, i32
  }
  func.func @transform_4(%arg0: i32) -> (i32, i32) {
    %c0_i32 = arith.constant 0 : i32
    %c0_i32_0 = arith.constant 0 : i32
    %c0_i32_1 = arith.constant 0 : i32
    return %c0_i32, %c0_i32_0 : i32, i32
  }
  func.func @transform_5(%arg0: i32) -> (i32, i32) {
    %c0_i32 = arith.constant 0 : i32
    %c0_i32_0 = arith.constant 0 : i32
    %c0_i32_1 = arith.constant 0 : i32
    return %c0_i32, %c0_i32_0 : i32, i32
  }
  func.func @transform_6(%arg0: i32) -> (i32, i32) {
    %c0_i32 = arith.constant 0 : i32
    %c0_i32_0 = arith.constant 0 : i32
    %c0_i32_1 = arith.constant 0 : i32
    return %c0_i32, %c0_i32_0 : i32, i32
  }
}

</mosaic_0001>

<llo_original>
// kernel: tpu_custom_call.1
$region0: #{tpu_custom_call.1}
  #allocation0 [shape = 'u32[]', space=smem, size = 0x4, offset = 0x4, fixed_abs, tag = 'smem constant byte address 0x4 - core index']
  #allocation1 [shape = 'u32[72,128]{1,0:T(1,128)}', space=vmem, size = 0x9000, scoped, tag = 'internal scratch']
  #allocation2 [shape = 'f32[8,8]{1,0:T(8,128)}', space=vmem, size = 0x1000, scoped, tag = 'scratch operand']
  #allocation3 [shape = 'f32[1,1]{1,0:T(1,128)}', space=vmem, size = 0x200, scoped, tag = 'scratch operand']
  %s0 = inlined_call_operand.vmem [shape: s32[8,1], index: 0, kind: input, shape index: {}]
  %s1 = inlined_call_operand.vmem [shape: s32[1,8], index: 1, kind: input, shape index: {}]
  %s2 = inlined_call_operand.hbm [shape: f32[2,8,128], index: 2, kind: input, shape index: {}]
  %s3 = inlined_call_operand.hbm [shape: f32[2,8,128], index: 3, kind: input, shape index: {}]
  %s4 = inlined_call_operand.vmem [shape: f32[8,128], index: 4, kind: input, shape index: {}]
  %s5 = inlined_call_operand.hbm [shape: f32[8,128], index: 5, kind: input, shape index: {}]
  %s6 = inlined_call_operand.hbm [shape: f32[1,2], index: 6, kind: output, shape index: {}]
  %s7 = sld [smem:[#allocation0]]
  $region77: #{tpu_custom_call.1} parent=0
    _
  %s9 = ssub.s32 1, %s7
  %s10 = scalar_select 0, %s9, %s7
  $region1: #{tpu_custom_call.1} parent=0
    #allocation4 [shape = 'u8[8192]{0}', space=vmem, size = 0x2000, scoped, tag = 'input window, operand 2']
    #allocation5 [shape = 's32[2]{0}', space=sflag, size = 0x8, scoped, tag = 'scoped memory for tpu_custom_call.1']
    #allocation6 [shape = 's32[2]{0}', space=sflag, size = 0x8, scoped, tag = 'scoped memory for tpu_custom_call.1']
    #allocation7 [shape = 'u8[8192]{0}', space=vmem, size = 0x2000, scoped, tag = 'input window, operand 3']
    #allocation8 [shape = 's32[2]{0}', space=sflag, size = 0x8, scoped, tag = 'scoped memory for tpu_custom_call.1']
    #allocation9 [shape = 'u8[4096]{0}', space=vmem, size = 0x1000, scoped, tag = 'input window, operand 5, single buffered']
    #allocation10 [shape = 'u8[512]{0}', space=vmem, size = 0x400, scoped, tag = 'output window, operand 0, single buffered']
    %11 = vsyncpa [#allocation5], 0
    %s12 = scalar_lea.sflag [#allocation5], 1
    %13 = vsyncpa %s12, 0
    %14 = vsyncpa [#allocation8], 0
    %s15 = scalar_lea.sflag [#allocation8], 1
    %16 = vsyncpa %s15, 0
    %17 = vsyncpa [#allocation6], 0
    loop: start=0, step=1, limit=4
    $region2: #{tpu_custom_call.1} parent=1 // loop_pre_header
      _
    $region3: #{tpu_custom_call.1} parent=1 // loop_header
      %s19 = sphi 0, %s23
      %p20 = scmp.ge.s32.totalorder %s19, 4
      %s27 = sphi 0, %s27
      %s29 = sphi 0, %s27
      %s30 = sphi 0, %s29
      %s44 = sphi 0, %s30
      %s48 = sphi 0, %s48
      %s50 = sphi 0, %s48
      %s51 = sphi 0, %s50
      %s65 = sphi 0, %s51
      %s71 = sphi 0, %s73
      %s74 = sphi 0, %s71
      %s75 = sphi 0, %s74
      %s91 = sphi 0, %s75
      %s97 = sphi 0, %s99
      %s100 = sphi 0, %s97
      %s101 = sphi 0, %s100
      %s117 = sphi 0, %s101
      %s121 = sphi 0, %s121
      %s123 = sphi 0, %s121
      %s124 = sphi 0, %s123
      %s138 = sphi 0, %s124
      %s142 = sphi 0, %s142
      %s144 = sphi 0, %s142
      %s145 = sphi 0, %s144
      %s159 = sphi 0, %s145
      %s163 = sphi 0, %s163
      %s165 = sphi 0, %s163
      %s166 = sphi 0, %s165
      %s180 = sphi 0, %s166
    $region4: #{tpu_custom_call.1} parent=1 // loop_header_branch
      %22 = sbr.rel (%p20) target = $region8
    $region5: #{tpu_custom_call.1} parent=1 // loop_body
      %s24 = ssub.s32 %s19, 1
      %s25 = ssub.s32 %s19, 2
      %s26 = sadd.s32 %s19, 1
      %s28 = sadd.s32 %s27, 1
      %p31 = scmp.eq.s32.totalorder %s19, 1
      %p32 = scmp.ne.s32.totalorder %s27, %s29
      %p33 = scmp.eq.s32.totalorder %s19, 0
      %p34 = por %p32, %p33
      %p35 = scmp.ne.s32.totalorder %s27, %s29
      %p36 = scmp.eq.s32.totalorder %s24, 1
      %p37 = por %p35, %p36
      %p38 = scmp.ne.s32.totalorder %s29, %s30
      %p39 = scmp.eq.s32.totalorder %s24, 0
      %p40 = por %p38, %p39
      %p41 = scmp.ne.s32.totalorder %s29, %s30
      %p42 = scmp.eq.s32.totalorder %s25, 1
      %p43 = por %p41, %p42
      %p45 = scmp.ne.s32.totalorder %s30, %s44
      %p46 = scmp.eq.s32.totalorder %s25, 0
      %p47 = por %p45, %p46
      %s49 = sadd.s32 %s48, 1
      %p52 = scmp.eq.s32.totalorder %s19, 1
      %p53 = scmp.ne.s32.totalorder %s48, %s50
      %p54 = scmp.eq.s32.totalorder %s19, 0
      %p55 = por %p53, %p54
      %p56 = scmp.ne.s32.totalorder %s48, %s50
      %p57 = scmp.eq.s32.totalorder %s24, 1
      %p58 = por %p56, %p57
      %p59 = scmp.ne.s32.totalorder %s50, %s51
      %p60 = scmp.eq.s32.totalorder %s24, 0
      %p61 = por %p59, %p60
      %p62 = scmp.ne.s32.totalorder %s50, %s51
      %p63 = scmp.eq.s32.totalorder %s25, 1
      %p64 = por %p62, %p63
      %p66 = scmp.ne.s32.totalorder %s51, %s65
      %p67 = scmp.eq.s32.totalorder %s25, 0
      %p68 = por %p66, %p67
      %s69 = ssub.s32 %s19, %s26
      %p70 = scmp.eq.s32.totalorder %s69, 0
      %s72 = sadd.s32 %s71, 1
      %s73 = scalar_select %p70, %s71, %s72
      %p76 = pneg %p70
      %p77 = scmp.eq.s32.totalorder %s19, 1
      %p78 = por %p76, %p77
      %p79 = scmp.ne.s32.totalorder %s71, %s74
      %p80 = scmp.eq.s32.totalorder %s19, 0
      %p81 = por %p79, %p80
      %p82 = scmp.ne.s32.totalorder %s71, %s74
      %p83 = scmp.eq.s32.totalorder %s24, 1
      %p84 = por %p82, %p83
      %p85 = scmp.ne.s32.totalorder %s74, %s75
      %p86 = scmp.eq.s32.totalorder %s24, 0
      %p87 = por %p85, %p86
      %p88 = scmp.ne.s32.totalorder %s74, %s75
      %p89 = scmp.eq.s32.totalorder %s25, 1
      %p90 = por %p88, %p89
      %p92 = scmp.ne.s32.totalorder %s75, %s91
      %p93 = scmp.eq.s32.totalorder %s25, 0
      %p94 = por %p92, %p93
      %s95 = ssub.s32 %s19, %s26
      %p96 = scmp.eq.s32.totalorder %s95, 0
      %s98 = sadd.s32 %s97, 1
      %s99 = scalar_select %p96, %s97, %s98
      %p102 = pneg %p96
      %p103 = scmp.eq.s32.totalorder %s19, 1
      %p104 = por %p102, %p103
      %p105 = scmp.ne.s32.totalorder %s97, %s100
      %p106 = scmp.eq.s32.totalorder %s19, 0
      %p107 = por %p105, %p106
      %p108 = scmp.ne.s32.totalorder %s97, %s100
      %p109 = scmp.eq.s32.totalorder %s24, 1
      %p110 = por %p108, %p109
      %p111 = scmp.ne.s32.totalorder %s100, %s101
      %p112 = scmp.eq.s32.totalorder %s24, 0
      %p113 = por %p111, %p112
      %p114 = scmp.ne.s32.totalorder %s100, %s101
      %p115 = scmp.eq.s32.totalorder %s25, 1
      %p116 = por %p114, %p115
      %p118 = scmp.ne.s32.totalorder %s101, %s117
      %p119 = scmp.eq.s32.totalorder %s25, 0
      %p120 = por %p118, %p119
      %s122 = sadd.s32 %s121, 1
      %p125 = scmp.eq.s32.totalorder %s19, 1
      %p126 = scmp.ne.s32.totalorder %s121, %s123
      %p127 = scmp.eq.s32.totalorder %s19, 0
      %p128 = por %p126, %p127
      %p129 = scmp.ne.s32.totalorder %s121, %s123
      %p130 = scmp.eq.s32.totalorder %s24, 1
      %p131 = por %p129, %p130
      %p132 = scmp.ne.s32.totalorder %s123, %s124
      %p133 = scmp.eq.s32.totalorder %s24, 0
      %p134 = por %p132, %p133
      %p135 = scmp.ne.s32.totalorder %s123, %s124
      %p136 = scmp.eq.s32.totalorder %s25, 1
      %p137 = por %p135, %p136
      %p139 = scmp.ne.s32.totalorder %s124, %s138
      %p140 = scmp.eq.s32.totalorder %s25, 0
      %p141 = por %p139, %p140
      %s143 = sadd.s32 %s142, 1
      %p146 = scmp.eq.s32.totalorder %s19, 1
      %p147 = scmp.ne.s32.totalorder %s142, %s144
      %p148 = scmp.eq.s32.totalorder %s19, 0
      %p149 = por %p147, %p148
      %p150 = scmp.ne.s32.totalorder %s142, %s144
      %p151 = scmp.eq.s32.totalorder %s24, 1
      %p152 = por %p150, %p151
      %p153 = scmp.ne.s32.totalorder %s144, %s145
      %p154 = scmp.eq.s32.totalorder %s24, 0
      %p155 = por %p153, %p154
      %p156 = scmp.ne.s32.totalorder %s144, %s145
      %p157 = scmp.eq.s32.totalorder %s25, 1
      %p158 = por %p156, %p157
      %p160 = scmp.ne.s32.totalorder %s145, %s159
      %p161 = scmp.eq.s32.totalorder %s25, 0
      %p162 = por %p160, %p161
      %s164 = sadd.s32 %s163, 1
      %p167 = scmp.eq.s32.totalorder %s19, 1
      %p168 = scmp.ne.s32.totalorder %s163, %s165
      %p169 = scmp.eq.s32.totalorder %s19, 0
      %p170 = por %p168, %p169
      %p171 = scmp.ne.s32.totalorder %s163, %s165
      %p172 = scmp.eq.s32.totalorder %s24, 1
      %p173 = por %p171, %p172
      %p174 = scmp.ne.s32.totalorder %s165, %s166
      %p175 = scmp.eq.s32.totalorder %s24, 0
      %p176 = por %p174, %p175
      %p177 = scmp.ne.s32.totalorder %s165, %s166
      %p178 = scmp.eq.s32.totalorder %s25, 1
      %p179 = por %p177, %p178
      %p181 = scmp.ne.s32.totalorder %s166, %s180
      %p182 = scmp.eq.s32.totalorder %s25, 0
      %p183 = por %p181, %p182
      %p184 = scmp.le.s32.totalorder 1, %s19
      %p185 = scmp.lt.s32.totalorder %s19, 3
      %p186 = pnand %p184, %p185
      %p187 = pneg %p186
      // Predicated region
      $region9: #{tpu_custom_call.1} parent=5 // pred_check
        _
      $region10: #{tpu_custom_call.1} parent=5 // pred_check_branch
        %189 = sbr.rel (%p186) target = $region12
      $region11: #{tpu_custom_call.1} parent=5 // pred_region
        %s190 = ssub.s32 %s19, 1
        // Predicated region
        $region13: #{tpu_custom_call.1} parent=11 // pred_check
          %p191 = pneg %p40
        $region14: #{tpu_custom_call.1} parent=11 // pred_check_branch
          %193 = sbr.rel (%p191) target = $region16
        $region15: #{tpu_custom_call.1} parent=11 // pred_region
          _
        $region16: #{tpu_custom_call.1} parent=11 // pred_fallthru
          _
        // Predicated region
        $region17: #{tpu_custom_call.1} parent=11 // pred_check
          %p194 = pneg %p61
        $region18: #{tpu_custom_call.1} parent=11 // pred_check_branch
          %196 = sbr.rel (%p194) target = $region20
        $region19: #{tpu_custom_call.1} parent=11 // pred_region
          _
        $region20: #{tpu_custom_call.1} parent=11 // pred_fallthru
          _
        // Predicated region
        $region21: #{tpu_custom_call.1} parent=11 // pred_check
          %p197 = pneg %p134
        $region22: #{tpu_custom_call.1} parent=11 // pred_check_branch
          %199 = sbr.rel (%p197) target = $region24
        $region23: #{tpu_custom_call.1} parent=11 // pred_region
          _
        $region24: #{tpu_custom_call.1} parent=11 // pred_fallthru
          _
        // Predicated region
        $region25: #{tpu_custom_call.1} parent=11 // pred_check
          %p200 = pneg %p155
        $region26: #{tpu_custom_call.1} parent=11 // pred_check_branch
          %202 = sbr.rel (%p200) target = $region28
        $region27: #{tpu_custom_call.1} parent=11 // pred_region
          %204 = vsyncadd [#allocation8], 0
          %s206 = sshll.u32 %s5, 4
          %s207 = int_to_ptr.hbm [resolvable:$true] %s206
          %s208 = sshll.u32 [#allocation9], 4
          %s209 = int_to_ptr.vmem [resolvable:$true] %s208
          %211 = dma.hbm_to_vmem [thread:$0]  %s207, 128, %s209, [#allocation8]
        $region28: #{tpu_custom_call.1} parent=11 // pred_fallthru
          _
      $region12: #{tpu_custom_call.1} parent=5 // pred_fallthru
        _
      %p212 = scmp.lt.s32.totalorder %s19, 2
      // Predicated region
      $region29: #{tpu_custom_call.1} parent=5 // pred_check
        %p213 = pneg %p212
      $region30: #{tpu_custom_call.1} parent=5 // pred_check_branch
        %215 = sbr.rel (%p213) target = $region32
      $region31: #{tpu_custom_call.1} parent=5 // pred_region
        // Predicated region
        $region33: #{tpu_custom_call.1} parent=31 // pred_check
          %p216 = pneg %p81
        $region34: #{tpu_custom_call.1} parent=31 // pred_check_branch
          %218 = sbr.rel (%p216) target = $region36
        $region35: #{tpu_custom_call.1} parent=31 // pred_region
          %s219 = sand.u32 %s71, 1
          %s220 = scalar_lea.sflag [#allocation5], %s219
          %s221 = sand.u32 %s71, 1
          %s222 = smul.addr %s221, 8
          %s223 = scalar_lea.vmem [#allocation4], %s222
          %225 = vsyncadd %s220, 0
          %s226 = smul.addr %s19, 8
          %s227 = scalar_lea.hbm %s2, %s226
          %s229 = sshll.u32 %s227, 4
          %s230 = int_to_ptr.hbm [resolvable:$true] %s229
          %s231 = sshll.u32 %s223, 4
          %s232 = int_to_ptr.vmem [resolvable:$true] %s231
          %234 = dma.hbm_to_vmem [thread:$0]  %s230, 128, %s232, %s220
        $region36: #{tpu_custom_call.1} parent=31 // pred_fallthru
          _
        // Predicated region
        $region37: #{tpu_custom_call.1} parent=31 // pred_check
          %p235 = pneg %p107
        $region38: #{tpu_custom_call.1} parent=31 // pred_check_branch
          %237 = sbr.rel (%p235) target = $region40
        $region39: #{tpu_custom_call.1} parent=31 // pred_region
          %s238 = sand.u32 %s19, 1
          %s239 = scalar_lea.sflag [#allocation8], %s238
          %s240 = sand.u32 %s97, 1
          %s241 = smul.addr %s240, 8
          %s242 = scalar_lea.vmem [#allocation7], %s241
          %244 = vsyncadd %s239, 0
          %s245 = smul.addr %s19, 8
          %s246 = scalar_lea.hbm %s3, %s245
          %s248 = sshll.u32 %s246, 4
          %s249 = int_to_ptr.hbm [resolvable:$true] %s248
          %s250 = sshll.u32 %s242, 4
          %s251 = int_to_ptr.vmem [resolvable:$true] %s250
          %253 = dma.hbm_to_vmem [thread:$0]  %s249, 128, %s251, %s239
        $region40: #{tpu_custom_call.1} parent=31 // pred_fallthru
          _
      $region32: #{tpu_custom_call.1} parent=5 // pred_fallthru
        _
      %p254 = scmp.le.s32.totalorder 1, %s19
      %p255 = scmp.lt.s32.totalorder %s19, 3
      %p256 = pnand %p254, %p255
      %p257 = pneg %p256
      // Predicated region
      $region41: #{tpu_custom_call.1} parent=5 // pred_check
        _
      $region42: #{tpu_custom_call.1} parent=5 // pred_check_branch
        %259 = sbr.rel (%p256) target = $region44
      $region43: #{tpu_custom_call.1} parent=5 // pred_region
        %s260 = ssub.s32 %s19, 1
        %s261 = sand.u32 %s74, 1
        %s262 = scalar_lea.sflag [#allocation5], %s261
        %s263 = sand.u32 %s74, 1
        %s264 = smul.addr %s263, 8
        %s265 = scalar_lea.vmem [#allocation4], %s264
        // Predicated region
        $region45: #{tpu_custom_call.1} parent=43 // pred_check
          %p266 = pneg %p87
        $region46: #{tpu_custom_call.1} parent=43 // pred_check_branch
          %268 = sbr.rel (%p266) target = $region48
        $region47: #{tpu_custom_call.1} parent=43 // pred_region
          %270 = dma.done %s262, 128
        $region48: #{tpu_custom_call.1} parent=43 // pred_fallthru
          _
        %s271 = sand.u32 %s24, 1
        %s272 = scalar_lea.sflag [#allocation8], %s271
        %s273 = sand.u32 %s100, 1
        %s274 = smul.addr %s273, 8
        %s275 = scalar_lea.vmem [#allocation7], %s274
        // Predicated region
        $region49: #{tpu_custom_call.1} parent=43 // pred_check
          %p276 = pneg %p113
        $region50: #{tpu_custom_call.1} parent=43 // pred_check_branch
          %278 = sbr.rel (%p276) target = $region52
        $region51: #{tpu_custom_call.1} parent=43 // pred_region
          %280 = dma.done %s272, 128
        $region52: #{tpu_custom_call.1} parent=43 // pred_fallthru
          _
        // Predicated region
        $region53: #{tpu_custom_call.1} parent=43 // pred_check
          %p281 = pneg %p155
        $region54: #{tpu_custom_call.1} parent=43 // pred_check_branch
          %283 = sbr.rel (%p281) target = $region56
        $region55: #{tpu_custom_call.1} parent=43 // pred_region
          %285 = dma.done [#allocation8], 128
        $region56: #{tpu_custom_call.1} parent=43 // pred_fallthru
          _
        %p286 = pneg %p40
        %p287 = pneg %p37
        %p288 = pneg %p61
        %p289 = pneg %p58
        %s290 = sand.u32 %s74, 1
        %s291 = scalar_lea.sflag [#allocation5], %s290
        %s292 = sand.u32 %s74, 1
        %s293 = smul.addr %s292, 8
        %s294 = scalar_lea.vmem [#allocation4], %s293
        %p295 = pneg %p87
        %p296 = pneg %p84
        %s297 = sand.u32 %s24, 1
        %s298 = scalar_lea.sflag [#allocation8], %s297
        %s299 = sand.u32 %s100, 1
        %s300 = smul.addr %s299, 8
        %s301 = scalar_lea.vmem [#allocation7], %s300
        %p302 = pneg %p113
        %p303 = pneg %p110
        %p304 = pneg %p134
        %p305 = pneg %p131
        %p306 = pneg %p155
        %p307 = pneg %p152
        %p308 = pneg %p176
        %p309 = pneg %p173
        %p310 = scmp.eq.s32.totalorder %s24, 0
        // Predicated region
        $region57: #{tpu_custom_call.1} parent=43 // pred_check
          %p311 = pneg %p310
        $region58: #{tpu_custom_call.1} parent=43 // pred_check_branch
          %313 = sbr.rel (%p311) target = $region60
        $region59: #{tpu_custom_call.1} parent=43 // pred_region
          %v314 = vld [vmem:[%s0] sm:$0xff]
          %v315 = vld [vmem:[%s1] sm:$0x1]
          %316 = vset.pattern.permute.xlu0 0
          %317 = vperm.xlu0 %316, %v314
          %v318 = vpop.permute.xlu0 %317
          %v319 = vperm.slane %v315, 0
          %vm320 = vcmp.eq.s32.totalorder %v318, %v319
          %v321 = vsel %vm320, 1, 0
          %v322 = vcvt.s32.f32 %v321
          %vm323 = vcmask 64512
          %v324 = vsel %vm323, %v322, 0.0
          %v325 = vrot.slane %v324, 4
          %v326 = vadd.f32 %v324, %v325
          %v327 = vrot.slane %v326, 2
          %v328 = vadd.f32 %v326, %v327
          %v329 = vrot.slane %v328, 1
          %v330 = vadd.f32 %v328, %v329
          %v331 = vrsqrt.pop %v330
          %v332 = vmul.f32 %v331, %v330
          %v333 = vmul.f32 %v332, %v331
          %v334 = vmul.f32 0.5, %v333
          %v335 = vsub.f32 1.5, %v334
          %v336 = vmul.f32 %v331, %v335
          %vm337 = vweird.f32 %v330
          %vm338 = vweird.f32 %v331
          %vm339 = vmor %vm337, %vm338
          %v340 = vsel %vm339, %v331, %v336
          %v341 = vmul.f32 %v322, %v340
          %v342 = vadd.f32 %v341, 1e-08
          %v343 = vlog2.pop %v342
          %v344 = vmul.f32 %v343, 0.6931472
          %345 = vst.msk [vmem:[#allocation2] sm:$0xff] %vm323, %v344
          %vm346 = vcmask 0
          %347 = vst.msk [vmem:[#allocation3] sm:$0x1] %vm346, 0.0
        $region60: #{tpu_custom_call.1} parent=43 // pred_fallthru
          _
        %v348 = vld [vmem:[%s265] sm:$0xff]
        %v349 = vld [vmem:[%s275] sm:$0xff]
        %v350 = vmul.f32 %v349, %v349
        %351 = vmatpush.xpose.msra.mxu0 0.0
        %352 = vmatpush.xpose.msra.mxu0 0.0
        %353 = vmatpush.xpose.msra.mxu0 0.0
        %354 = vmatpush.xpose.msra.mxu0 0.0
        %355 = vmatpush.xpose.msra.mxu0 0.0
        %356 = vmatpush.xpose.msra.mxu0 0.0
        %357 = vmatpush.xpose.msra.mxu0 0.0
        %358 = vmatpush.xpose.msra.mxu0 0.0
        %359 = vmatpush.xpose.msra.mxu0 0.0
        %360 = vmatpush.xpose.msra.mxu0 0.0
        %361 = vmatpush.xpose.msra.mxu0 0.0
        %362 = vmatpush.xpose.msra.mxu0 0.0
        %363 = vmatpush.xpose.msra.mxu0 0.0
        %364 = vmatpush.xpose.msra.mxu0 0.0
        %365 = vmatpush.xpose.msra.mxu0 0.0
        %366 = vmatpush.xpose.msra.mxu0 %v350
        %367 = vmatmul.f32.gmra.mxu0 1.0
        %v368 = vpop.f32.mrf.mxu0
        %v369 = vadd.f32 1e-12, %v368
        %370 = vdwg.mxu0
        %v371 = vrsqrt.pop %v369
        %v372 = vmul.f32 %v371, %v369
        %v373 = vmul.f32 %v372, %v371
        %v374 = vmul.f32 0.5, %v373
        %v375 = vsub.f32 1.5, %v374
        %v376 = vmul.f32 %v371, %v375
        %vm377 = vweird.f32 %v369
        %vm378 = vweird.f32 %v371
        %vm379 = vmor %vm377, %vm378
        %v380 = vsel %vm379, %v371, %v376
        %v381 = vmul.f32 %v348, %v348
        %382 = vmatpush.xpose.msra.mxu0 0.0
        %383 = vmatpush.xpose.msra.mxu0 0.0
        %384 = vmatpush.xpose.msra.mxu0 0.0
        %385 = vmatpush.xpose.msra.mxu0 0.0
        %386 = vmatpush.xpose.msra.mxu0 0.0
        %387 = vmatpush.xpose.msra.mxu0 0.0
        %388 = vmatpush.xpose.msra.mxu0 0.0
        %389 = vmatpush.xpose.msra.mxu0 0.0
        %390 = vmatpush.xpose.msra.mxu0 0.0
        %391 = vmatpush.xpose.msra.mxu0 0.0
        %392 = vmatpush.xpose.msra.mxu0 0.0
        %393 = vmatpush.xpose.msra.mxu0 0.0
        %394 = vmatpush.xpose.msra.mxu0 0.0
        %395 = vmatpush.xpose.msra.mxu0 0.0
        %396 = vmatpush.xpose.msra.mxu0 0.0
        %397 = vmatpush.xpose.msra.mxu0 %v381
        %398 = vmatmul.f32.gmra.mxu0 1.0
        %v399 = vpop.f32.mrf.mxu0
        %v400 = vadd.f32 1e-12, %v399
        %401 = vdwg.mxu0
        %v402 = vrsqrt.pop %v400
        %v403 = vmul.f32 %v402, %v400
        %v404 = vmul.f32 %v403, %v402
        %v405 = vmul.f32 0.5, %v404
        %v406 = vsub.f32 1.5, %v405
        %v407 = vmul.f32 %v402, %v406
        %vm408 = vweird.f32 %v400
        %vm409 = vweird.f32 %v402
        %vm410 = vmor %vm408, %vm409
        %v411 = vsel %vm410, %v402, %v407
        %412 = vmatpush.xpose.msra.mxu0 0.0
        %413 = vmatpush.xpose.msra.mxu0 0.0
        %414 = vmatpush.xpose.msra.mxu0 0.0
        %415 = vmatpush.xpose.msra.mxu0 0.0
        %416 = vmatpush.xpose.msra.mxu0 0.0
        %417 = vmatpush.xpose.msra.mxu0 0.0
        %418 = vmatpush.xpose.msra.mxu0 0.0
        %419 = vmatpush.xpose.msra.mxu0 0.0
        %420 = vmatpush.xpose.msra.mxu0 0.0
        %421 = vmatpush.xpose.msra.mxu0 0.0
        %422 = vmatpush.xpose.msra.mxu0 0.0
        %423 = vmatpush.xpose.msra.mxu0 0.0
        %424 = vmatpush.xpose.msra.mxu0 0.0
        %425 = vmatpush.xpose.msra.mxu0 0.0
        %426 = vmatpush.xpose.msra.mxu0 0.0
        %427 = vmatpush.xpose.msra.mxu0 %v349
        %428 = vmatmul.f32.gmra.mxu0 %v348
        %v429 = vpop.f32.mrf.mxu0
        %v430 = vadd.f32 0.0, %v429
        %431 = vdwg.mxu0
        %v432 = vperm.slane %v380, 0
        %v433 = vmul.f32 %v430, %v432
        %434 = vxpose.xlu0.b32.start [1/16] %v430, 128
        %435 = vxpose.xlu0.b32.cont [2/16] 0.0, 128
        %436 = vxpose.xlu0.b32.cont [3/16] 0.0, 128
        %437 = vxpose.xlu0.b32.cont [4/16] 0.0, 128
        %438 = vxpose.xlu0.b32.cont [5/16] 0.0, 128
        %439 = vxpose.xlu0.b32.cont [6/16] 0.0, 128
        %440 = vxpose.xlu0.b32.cont [7/16] 0.0, 128
        %441 = vxpose.xlu0.b32.cont [8/16] 0.0, 128
        %442 = vxpose.xlu0.b32.cont [9/16] 0.0, 128
        %443 = vxpose.xlu0.b32.cont [10/16] 0.0, 128
        %444 = vxpose.xlu0.b32.cont [11/16] 0.0, 128
        %445 = vxpose.xlu0.b32.cont [12/16] 0.0, 128
        %446 = vxpose.xlu0.b32.cont [13/16] 0.0, 128
        %447 = vxpose.xlu0.b32.cont [14/16] 0.0, 128
        %448 = vxpose.xlu0.b32.cont [15/16] 0.0, 128
        %449 = vxpose.xlu0.b32.end [16/16] 0.0, 128
        %v450 = vpop.trf.xlu0
        %v451 = vpop.trf.xlu0
        %v452 = vpop.trf.xlu0
        %v453 = vpop.trf.xlu0
        %v454 = vpop.trf.xlu0
        %v455 = vpop.trf.xlu0
        %v456 = vpop.trf.xlu0
        %v457 = vpop.trf.xlu0
        %v458 = vpop.trf.xlu0
        %v459 = vpop.trf.xlu0
        %v460 = vpop.trf.xlu0
        %v461 = vpop.trf.xlu0
        %v462 = vpop.trf.xlu0
        %v463 = vpop.trf.xlu0
        %v464 = vpop.trf.xlu0
        %v465 = vpop.trf.xlu0
        %v466 = vperm.slane %v411, 0
        %v467 = vmul.f32 %v450, %v466
        %v468 = vld [vmem:[#allocation2] sm:$0xff]
        %vm469 = vcmask 64512
        %v470 = vsel %vm469, %v433, -inf
        %471 = vmax.xlane.f32.xlu0 %v470
        %v472 = vpop.xlane.xlu0 %471
        %v473 = vsub.f32 %v433, %v472
        %v474 = vmul.f32 %v473, 1.442695
        %v475 = vpow.pop %v474
        %v476 = vsel %vm469, %v475, 0.0
        %477 = vadd.xlane.f32.xlu0 %v476
        %v478 = vpop.xlane.xlu0 %477
        %v479 = vrcp.pop %v478
        %v480 = vmul.f32 %v475, %v479
        %v481 = vlog2.pop %v478
        %v482 = vmul.f32 %v481, 0.6931472
        %v483 = vsub.f32 %v473, %v482
        %v484 = vsel %vm469, %v467, -inf
        %485 = vmax.xlane.f32.xlu0 %v484
        %v486 = vpop.xlane.xlu0 %485
        %v487 = vsub.f32 %v467, %v486
        %v488 = vmul.f32 %v487, 1.442695
        %v489 = vpow.pop %v488
        %v490 = vsel %vm469, %v489, 0.0
        %491 = vadd.xlane.f32.xlu0 %v490
        %v492 = vpop.xlane.xlu0 %491
        %v493 = vrcp.pop %v492
        %v494 = vmul.f32 %v489, %v493
        %v495 = vlog2.pop %v492
        %v496 = vmul.f32 %v495, 0.6931472
        %v497 = vsub.f32 %v487, %v496
        %v498 = vsub.f32 %v483, %v468
        %v499 = vmul.f32 %v480, %v498
        %v500 = vsel %vm469, %v499, 0.0
        %501 = vadd.xlane.f32.xlu0 %v500
        %v502 = vpop.xlane.xlu0 %501
        %v503 = vrot.slane %v502, 4
        %v504 = vadd.f32 %v502, %v503
        %v505 = vrot.slane %v504, 2
        %v506 = vadd.f32 %v504, %v505
        %v507 = vrot.slane %v506, 1
        %v508 = vadd.f32 %v506, %v507
        %v509 = vrcp.pop 8.0
        %v510 = vmul.f32 8.0, %v509
        %v511 = vsub.f32 1.0, %v510
        %v512 = vmul.f32 %v509, %v511
        %v513 = vadd.f32 %v509, %v512
        %vm514 = vweird.f32 %v509
        %v515 = vsel %vm514, %v509, %v513
        %v516 = vmul.f32 %v508, %v515
        %v517 = vsub.f32 %v497, %v468
        %v518 = vmul.f32 %v494, %v517
        %v519 = vsel %vm469, %v518, 0.0
        %520 = vadd.xlane.f32.xlu0 %v519
        %v521 = vpop.xlane.xlu0 %520
        %v522 = vrot.slane %v521, 4
        %v523 = vadd.f32 %v521, %v522
        %v524 = vrot.slane %v523, 2
        %v525 = vadd.f32 %v523, %v524
        %v526 = vrot.slane %v525, 1
        %v527 = vadd.f32 %v525, %v526
        %v528 = vmul.f32 %v527, %v515
        %v529 = vld [vmem:[#allocation3] sm:$0x1]
        %v530 = vadd.f32 %v516, %v528
        %v531 = vadd.f32 %v529, %v530
        %vm532 = vcmask 0
        %533 = vst.msk [vmem:[#allocation3] sm:$0x1] %vm532, %v531
        %p534 = scmp.eq.s32.totalorder %s24, 1
        // Predicated region
        $region61: #{tpu_custom_call.1} parent=43 // pred_check
          %p535 = pneg %p534
        $region62: #{tpu_custom_call.1} parent=43 // pred_check_branch
          %537 = sbr.rel (%p535) target = $region64
        $region63: #{tpu_custom_call.1} parent=43 // pred_region
          %v538 = vld [vmem:[%s0] sm:$0xff]
          %v539 = vld [vmem:[%s1] sm:$0x1]
          %540 = vset.pattern.permute.xlu0 0
          %541 = vperm.xlu0 %540, %v538
          %v542 = vpop.permute.xlu0 %541
          %v543 = vperm.slane %v539, 0
          %vm544 = vcmp.eq.s32.totalorder %v542, %v543
          %v545 = vsel %vm544, 1, 0
          %v546 = vcvt.s32.f32 %v545
          %v547 = vld [vmem:[%s4] sm:$0xff]
          %v548 = vld [vmem:[#allocation9] sm:$0xff]
          %v549 = vmul.f32 %v547, %v547
          %550 = vadd.xlane.f32.xlu0 %v549
          %v551 = vpop.xlane.xlu0 %550
          %v552 = vadd.f32 %v551, 1e-12
          %v553 = vrsqrt.pop %v552
          %v554 = vmul.f32 %v553, %v552
          %v555 = vmul.f32 %v554, %v553
          %v556 = vmul.f32 0.5, %v555
          %v557 = vsub.f32 1.5, %v556
          %v558 = vmul.f32 %v553, %v557
          %vm559 = vweird.f32 %v552
          %vm560 = vweird.f32 %v553
          %vm561 = vmor %vm559, %vm560
          %v562 = vsel %vm561, %v553, %v558
          %v563 = vmul.f32 %v547, %v562
          %v564 = vmul.f32 %v548, %v548
          %565 = vadd.xlane.f32.xlu0 %v564
          %v566 = vpop.xlane.xlu0 %565
          %v567 = vadd.f32 %v566, 1e-12
          %v568 = vrsqrt.pop %v567
          %v569 = vmul.f32 %v568, %v567
          %v570 = vmul.f32 %v569, %v568
          %v571 = vmul.f32 0.5, %v570
          %v572 = vsub.f32 1.5, %v571
          %v573 = vmul.f32 %v568, %v572
          %vm574 = vweird.f32 %v567
          %vm575 = vweird.f32 %v568
          %vm576 = vmor %vm574, %vm575
          %v577 = vsel %vm576, %v568, %v573
          %v578 = vmul.f32 %v548, %v577
          %579 = vmatpush.xpose.msra.mxu0 0.0
          %580 = vmatpush.xpose.msra.mxu0 0.0
          %581 = vmatpush.xpose.msra.mxu0 0.0
          %582 = vmatpush.xpose.msra.mxu0 0.0
          %583 = vmatpush.xpose.msra.mxu0 0.0
          %584 = vmatpush.xpose.msra.mxu0 0.0
          %585 = vmatpush.xpose.msra.mxu0 0.0
          %586 = vmatpush.xpose.msra.mxu0 0.0
          %587 = vmatpush.xpose.msra.mxu0 0.0
          %588 = vmatpush.xpose.msra.mxu0 0.0
          %589 = vmatpush.xpose.msra.mxu0 0.0
          %590 = vmatpush.xpose.msra.mxu0 0.0
          %591 = vmatpush.xpose.msra.mxu0 0.0
          %592 = vmatpush.xpose.msra.mxu0 0.0
          %593 = vmatpush.xpose.msra.mxu0 0.0
          %594 = vmatpush.xpose.msra.mxu0 %v578
          %595 = vmatmul.f32.gmra.mxu0 %v563
          %v596 = vpop.f32.mrf.mxu0
          %v597 = vadd.f32 0.0, %v596
          %598 = vdwg.mxu0
          %v599 = vsub.f32 %v597, 0.6
          %v600 = vmul.f32 %v599, -10.0
          %v601 = vmul.f32 %v600, 1.442695
          %v602 = vpow.pop %v601
          %v603 = vadd.f32 %v602, 1.0
          %v604 = vlog2.pop %v603
          %v605 = vmul.f32 %v604, 0.6931472
          %v606 = vsub.f32 %v597, 0.4
          %v607 = vmul.f32 %v606, 40.0
          %v608 = vmul.f32 %v607, 1.442695
          %v609 = vpow.pop %v608
          %v610 = vadd.f32 %v609, 1.0
          %v611 = vlog2.pop %v610
          %v612 = vmul.f32 %v611, 0.6931472
          %v613 = vmul.f32 %v546, %v605
          %v614 = vsub.f32 1.0, %v546
          %v615 = vmul.f32 %v614, %v612
          %v616 = vadd.f32 %v613, %v615
          %v617 = vsel %vm469, %v616, 0.0
          %618 = vadd.xlane.f32.xlu0 %v617
          %v619 = vpop.xlane.xlu0 %618
          %v620 = vrot.slane %v619, 4
          %v621 = vadd.f32 %v619, %v620
          %v622 = vrot.slane %v621, 2
          %v623 = vadd.f32 %v621, %v622
          %v624 = vrot.slane %v623, 1
          %v625 = vadd.f32 %v623, %v624
          %v626 = vmul.f32 %v625, 0.25
          %v627 = vlaneseq
          %v628 = vand.u32 %v627, 127
          %vm629 = vcmp.eq.s32.totalorder %v628, 0
          %v630 = vld [vmem:[#allocation3] sm:$0x1]
          %632 = vset.pattern.permute.xlu0 0
          %633 = vperm.xlu0 %632, %v630
          %v634 = vpop.permute.xlu0 %633
          %v636 = vperm.slane %v634, 0
          %v637 = vsel %vm629, %v636, %v626
          %vm638 = vcmask 8192
          %639 = vst.msk [vmem:[#allocation10] sm:$0x1] %vm638, %v637
        $region64: #{tpu_custom_call.1} parent=43 // pred_fallthru
          _
        // Predicated region
        $region65: #{tpu_custom_call.1} parent=43 // pred_check
          %p640 = pneg %p173
        $region66: #{tpu_custom_call.1} parent=43 // pred_check_branch
          %642 = sbr.rel (%p640) target = $region68
        $region67: #{tpu_custom_call.1} parent=43 // pred_region
          %644 = vsyncadd [#allocation6], 0
          %s646 = sshll.u32 [#allocation10], 4
          %s647 = int_to_ptr.vmem [resolvable:$true] %s646
          %s648 = sshll.u32 %s6, 4
          %s649 = int_to_ptr.hbm [resolvable:$true] %s648
          %651 = dma.vmem_to_hbm [thread:$0]  %s647, 16, %s649, [#allocation6]
        $region68: #{tpu_custom_call.1} parent=43 // pred_fallthru
          _
        // Predicated region
        $region69: #{tpu_custom_call.1} parent=43 // pred_check
          %p652 = pneg %p173
        $region70: #{tpu_custom_call.1} parent=43 // pred_check_branch
          %654 = sbr.rel (%p652) target = $region72
        $region71: #{tpu_custom_call.1} parent=43 // pred_region
          %656 = dma.done [#allocation6], 16
        $region72: #{tpu_custom_call.1} parent=43 // pred_fallthru
          _
      $region44: #{tpu_custom_call.1} parent=5 // pred_fallthru
        _
      %p657 = scmp.le.s32.totalorder 2, %s19
      // Predicated region
      $region73: #{tpu_custom_call.1} parent=5 // pred_check
        %p658 = pneg %p657
      $region74: #{tpu_custom_call.1} parent=5 // pred_check_branch
        %660 = sbr.rel (%p658) target = $region76
      $region75: #{tpu_custom_call.1} parent=5 // pred_region
        %s661 = ssub.s32 %s19, 2
      $region76: #{tpu_custom_call.1} parent=5 // pred_fallthru
        _
    $region6: #{tpu_custom_call.1} parent=1 // loop_footer
      %s23 = sadd.s32 1, %s19
    $region7: #{tpu_custom_call.1} parent=1 // loop_footer_branch
      %18 = sbr.rel target = $region3
    $region8: #{tpu_custom_call.1} parent=1 // loop_exit
      _
    %662 = vsyncpa [#allocation5], 1
    %s663 = scalar_lea.sflag [#allocation5], 1
    %664 = vsyncpa %s663, 1
    %665 = vsyncpa [#allocation8], 1
    %s666 = scalar_lea.sflag [#allocation8], 1
    %667 = vsyncpa %s666, 1
    %668 = vsyncpa [#allocation6], 1
    %s669 = scalar_lea.sflag [#allocation6], 1
    %670 = vsyncpa %s669, 1

</llo_original>
